<compile_context>
chip_gen: v7x
topology: tpu7x:2x2x1
jax: 0.10.0
libtpu: 0.0.40
codegen_flags: <defaults>
</compile_context>

<pallas_src>
import functools
import math

import numpy as np
import jax
import jax.numpy as jnp
from jax.experimental import pallas as pl
from jax.experimental.pallas import tpu as pltpu


# ------------------------------------------------------------------ kernels --

def _layernorm(x, w, b, eps=1e-5):
    mu = jnp.mean(x, axis=-1, keepdims=True)
    xc = x - mu
    var = jnp.mean(xc * xc, axis=-1, keepdims=True)
    return xc * jax.lax.rsqrt(var + eps) * w + b


def matmul_bias_kernel(x_ref, w_ref, b_ref, o_ref):
    # o = x @ w + b   (patch-embedding projection; bf16 operands, f32 acc)
    o_ref[...] = (jnp.dot(x_ref[...], w_ref[...],
                          preferred_element_type=jnp.float32) + b_ref[...])


def encoder_stack_kernel(x_ref, wqkv_ref, bqkv_ref, wo_ref, bo_ref,
                         ln1w_ref, ln1b_ref, w1_ref, b1_ref, w2_ref, b2_ref,
                         ln2w_ref, ln2b_ref, o_ref, qkv_scr, ctx_scr, *, nhead):
    """One grid step = (one patch-slot tile, one encoder layer).

    The output block index is constant over the layer axis, so o_ref stays
    resident in VMEM and carries activations layer-to-layer; HBM is touched
    once per token tile on the way in and once on the way out.  Per-layer
    weights stream via the index_map (DMA of layer l+1 overlaps compute of l).
    """
    l = pl.program_id(1)

    @pl.when(l == 0)
    def _():                                   # load this tile into the carry
        o_ref[...] = x_ref[...].astype(jnp.float32)

    x3 = o_ref[...]                            # (tN, L, E) f32 carry
    tN, L, E = x3.shape
    hd = E // nhead
    scale = 1.0 / math.sqrt(hd)

    x2 = x3.reshape(tN * L, E)
    xb = x2.astype(jnp.bfloat16)

    # Fused QKV projection: one MXU pass of output width 3E, staged in a bf16
    # VMEM scratch so the per-head slices below are cheap ref views instead of
    # lane slices of a live (tN*L, 3E) f32 value.
    qkv_scr[...] = (jnp.dot(xb, wqkv_ref[...],
                            preferred_element_type=jnp.float32)
                    + bqkv_ref[...]).astype(jnp.bfloat16)

    # TODO(synk): heads could be batched into one pair of einsums by staging
    # (nhead*tN, L, hd) Q/K/V scratches; kept as an unrolled loop over cheap
    # scratch slices here, with a single fused output projection afterwards.
    for h in range(nhead):
        q_h = qkv_scr[:, h * hd:(h + 1) * hd].reshape(tN, L, hd)
        k_h = qkv_scr[:, E + h * hd:E + (h + 1) * hd].reshape(tN, L, hd)
        v_h = qkv_scr[:, 2 * E + h * hd:2 * E + (h + 1) * hd].reshape(tN, L, hd)
        s = jnp.einsum('nld,nmd->nlm', q_h, k_h,
                       preferred_element_type=jnp.float32) * scale
        s = s - jnp.max(s, axis=-1, keepdims=True)
        p = jnp.exp(s)
        p = p * pl.reciprocal(jnp.sum(p, axis=-1, keepdims=True), approx=True)
        ctx = jnp.einsum('nlm,nmd->nld', p.astype(jnp.bfloat16), v_h,
                         preferred_element_type=jnp.float32)      # (tN, L, hd)
        ctx_scr[:, h * hd:(h + 1) * hd] = ctx.reshape(tN * L, hd)

    # Single full-K output projection (feeds the MXU with K=E instead of
    # nhead partial K=hd dots summed on the VPU).
    attn2 = jnp.dot(ctx_scr[...].astype(jnp.bfloat16), wo_ref[...],
                    preferred_element_type=jnp.float32) + bo_ref[...]

    y2 = _layernorm(x2 + attn2, ln1w_ref[...], ln1b_ref[...])
    # TODO(synk): dropout omitted (eval-mode identity; stochastic op)
    h2 = (jnp.dot(y2.astype(jnp.bfloat16), w1_ref[...],
                  preferred_element_type=jnp.float32)
          + b1_ref[...]).astype(jnp.bfloat16)          # bf16: only an MXU operand
    z2 = jnp.dot(h2, w2_ref[...],
                 preferred_element_type=jnp.float32) + b2_ref[...]
    out2 = _layernorm(z2 + z2, ln2w_ref[...], ln2b_ref[...])       # LN2(x + x)
    o_ref[...] = out2.reshape(tN, L, E)


def class_head_kernel(x_ref, lnw_ref, lnb_ref, w_ref, b_ref, o_ref):
    y = _layernorm(x_ref[...], lnw_ref[...], lnb_ref[...])
    o_ref[...] = (jnp.dot(y.astype(jnp.bfloat16), w_ref[...],
                          preferred_element_type=jnp.float32) + b_ref[...])


# --------------------------------------------------------- tiling heuristics --

def _largest_divisor_leq(n, cap):
    cap = max(1, min(int(cap), n))
    for t in range(cap, 0, -1):
        if n % t == 0:
            return t
    return 1


def _row_tile(n, target):
    """Largest row tile <= target dividing n (multiple of 8, or the full dim)."""
    if n <= target:
        return n
    for t in range(target - target % 8, 0, -8):
        if n % t == 0:
            return t
    return n


def _tpu_vmem_bytes():
    """Per-core VMEM capacity; conservative fallback if the query fails."""
    try:
        info = pltpu.get_tpu_info()
        cap = getattr(info, 'vmem_capacity_bytes', None)
        if cap:
            return int(cap)
    except Exception:
        pass
    try:
        kind = jax.devices()[0].device_kind.lower()
        if 'v7' in kind:
            return 64 * 1024 * 1024
    except Exception:
        pass
    return 128 * 1024 * 1024


def _encoder_tiling(Nt, L, D, F, vmem_cap):
    """Pick patch-slot tile tN and a vmem limit from the actual footprint."""
    small_vmem = vmem_cap <= 64 * 1024 * 1024            # v7x-class core
    # Per-layer streamed weights: bf16 matrices + f32 vectors, double-buffered
    # by the pipeline (layer l+1 prefetched while layer l computes).
    wl = 2 * (3 * D * D + D * D + 2 * D * F) + 4 * (3 * D + 6 * D + F)
    weight_stream = 2 * wl
    # Bytes per patch-slot row of: f32 carry, bf16 input (x2 buffers), bf16
    # QKV scratch, f32 ctx scratch, bf16 FFN intermediate, f32 temporaries.
    per_row = L * (4 * D + 2 * 2 * D + 6 * D + 4 * D + 2 * F + 16 * D)
    # Generation-specific per-tile budget; prefer tN == Nt when it fits so
    # each layer's weights are DMA'd exactly once per forward.
    gen_budget = (8 if small_vmem else 20) * 1024 * 1024
    headroom = (6 if small_vmem else 12) * 1024 * 1024
    tile_budget = max(1 << 20, min(gen_budget, vmem_cap - weight_stream - headroom))
    tN = _largest_divisor_leq(Nt, max(1, tile_budget // per_row))
    # TODO(synk): on v7x an even tile count (>=2) would let the 'parallel'
    # axis shard across both TensorCores at the cost of doubled weight DMA.
    need = weight_stream + 2 * tN * per_row + (4 << 20)
    hard_cap = (56 if small_vmem else 110) * 1024 * 1024
    vmem_limit = int(min(hard_cap, max(32 * 1024 * 1024, need)))
    return tN, vmem_limit


# ------------------------------------------------------------------ wrapper --

def vit_forward_pallas(img, params, cfg):
    B, C, H, W = img.shape
    P, D, Hn, F = cfg['patch'], cfg['embed'], cfg['heads'], cfg['ffn']
    Gh, Gw = H // P, W // P
    Np = Gh * Gw
    K = C * P * P

    vmem_cap = _tpu_vmem_bytes()
    small_vmem = vmem_cap <= 64 * 1024 * 1024

    # ---- patch embedding: stride-P conv == non-overlapping unfold + matmul --
    patches = img.reshape(B, C, Gh, P, Gw, P).transpose(0, 2, 4, 1, 3, 5)
    patches = patches.reshape(B * Np, K).astype(jnp.bfloat16)
    w_flat = params['proj_w'].reshape(D, K).T.astype(jnp.bfloat16)     # (K, D)
    b_flat = params['proj_b'].reshape(1, D).astype(jnp.float32)

    BNp = B * Np
    tR = _row_tile(BNp, 512 if small_vmem else 1024)
    pe = pl.pallas_call(
        matmul_bias_kernel,
        out_shape=jax.ShapeDtypeStruct((BNp, D), jnp.float32),
        grid=(BNp // tR,),
        in_specs=[pl.BlockSpec((tR, K), lambda i: (i, 0)),
                  pl.BlockSpec((K, D), lambda i: (0, 0)),      # resident weight
                  pl.BlockSpec((1, D), lambda i: (0, 0))],
        out_specs=pl.BlockSpec((tR, D), lambda i: (i, 0)),
        compiler_params=pltpu.CompilerParams(
            dimension_semantics=("parallel",)),
    )(patches, w_flat, b_flat)
    pe = pe.reshape(B, Np, D)

    # ---- cls token + positional embedding (glue) ----------------------------
    cls = jnp.broadcast_to(params['cls'], (B, 1, D)).astype(jnp.float32)
    x = jnp.concatenate([cls, pe], axis=1) + params['pos'][:, :Np + 1]
    x = jnp.transpose(x, (1, 0, 2))             # kernel layout (Np+1, B, D)
    x = x.astype(jnp.bfloat16)                  # halve inbound activation DMA

    # ---- encoder stack: ONE pallas_call over (patch-slot tiles, layers) -----
    Nt, L = Np + 1, B
    layers = params['layers']
    nl = len(layers)

    w_qkv = jnp.stack([lp['in_proj_w'].T for lp in layers]).astype(jnp.bfloat16)   # (nl,D,3D)
    b_qkv = jnp.stack([lp['in_proj_b'].reshape(1, 3 * D) for lp in layers])
    w_o = jnp.stack([lp['out_proj_w'].T for lp in layers]).astype(jnp.bfloat16)    # (nl,D,D)
    b_o = jnp.stack([lp['out_proj_b'].reshape(1, D) for lp in layers])
    ln1w = jnp.stack([lp['ln1_w'].reshape(1, D) for lp in layers])
    ln1b = jnp.stack([lp['ln1_b'].reshape(1, D) for lp in layers])
    w_1 = jnp.stack([lp['w1'].T for lp in layers]).astype(jnp.bfloat16)            # (nl,D,F)
    b_1 = jnp.stack([lp['b1'].reshape(1, F) for lp in layers])
    w_2 = jnp.stack([lp['w2'].T for lp in layers]).astype(jnp.bfloat16)            # (nl,F,D)
    b_2 = jnp.stack([lp['b2'].reshape(1, D) for lp in layers])
    ln2w = jnp.stack([lp['ln2_w'].reshape(1, D) for lp in layers])
    ln2b = jnp.stack([lp['ln2_b'].reshape(1, D) for lp in layers])

    tN, vmem_limit = _encoder_tiling(Nt, L, D, F, vmem_cap)

    tok_blk = lambda i, l: (i, 0, 0)            # tokens: constant over layers
    layer_w = lambda i, l: (l, 0, 0)            # weights: stream per layer

    x = pl.pallas_call(
        functools.partial(encoder_stack_kernel, nhead=Hn),
        out_shape=jax.ShapeDtypeStruct((Nt, L, D), jnp.float32),
        grid=(Nt // tN, nl),
        in_specs=[
            pl.BlockSpec((tN, L, D), tok_blk),
            pl.BlockSpec((None, D, 3 * D), layer_w),    # fused QKV weight
            pl.BlockSpec((None, 1, 3 * D), layer_w),
            pl.BlockSpec((None, D, D), layer_w),        # out proj
            pl.BlockSpec((None, 1, D), layer_w),
            pl.BlockSpec((None, 1, D), layer_w),        # ln1 w/b
            pl.BlockSpec((None, 1, D), layer_w),
            pl.BlockSpec((None, D, F), layer_w),        # ffn linear1
            pl.BlockSpec((None, 1, F), layer_w),
            pl.BlockSpec((None, F, D), layer_w),        # ffn linear2
            pl.BlockSpec((None, 1, D), layer_w),
            pl.BlockSpec((None, 1, D), layer_w),        # ln2 w/b
            pl.BlockSpec((None, 1, D), layer_w),
        ],
        out_specs=pl.BlockSpec((tN, L, D), tok_blk),
        scratch_shapes=[pltpu.VMEM((tN * L, 3 * D), jnp.bfloat16),   # fused QKV
                        pltpu.VMEM((tN * L, D), jnp.float32)],       # per-head ctx
        compiler_params=pltpu.CompilerParams(
            dimension_semantics=("parallel", "arbitrary"),
            vmem_limit_bytes=vmem_limit),
    )(x, w_qkv, b_qkv, w_o, b_o, ln1w, ln1b, w_1, b_1, w_2, b_2, ln2w, ln2b)

    # ---- class head on x_torch[:, 0, :]  ==  x[0] in kernel layout ----------
    out_dim = cfg['out']
    out_pad = ((out_dim + 127) // 128) * 128            # lane-dense store
    head_w = jnp.zeros((D, out_pad), jnp.float32)
    head_w = head_w.at[:, :out_dim].set(params['head_w'].T).astype(jnp.bfloat16)
    head_b = jnp.zeros((1, out_pad), jnp.float32)
    head_b = head_b.at[:, :out_dim].set(params['head_b'].reshape(1, -1))

    cls_tok = x[0]                                      # (B, D)
    out = pl.pallas_call(
        class_head_kernel,
        out_shape=jax.ShapeDtypeStruct((B, out_pad), jnp.float32),
        grid=(1,),
        in_specs=[pl.BlockSpec((B, D), lambda i: (0, 0)),
                  pl.BlockSpec((1, D), lambda i: (0, 0)),
                  pl.BlockSpec((1, D), lambda i: (0, 0)),
                  pl.BlockSpec((D, out_pad), lambda i: (0, 0)),
                  pl.BlockSpec((1, out_pad), lambda i: (0, 0))],
        out_specs=pl.BlockSpec((B, out_pad), lambda i: (0, 0)),
        compiler_params=pltpu.CompilerParams(
            dimension_semantics=("arbitrary",)),
    )(cls_tok,
      params['head_ln_w'].reshape(1, D).astype(jnp.float32),
      params['head_ln_b'].reshape(1, D).astype(jnp.float32),
      head_w, head_b)
    return out[:, :out_dim]


# ------------------------------------------------------ pure-JAX reference --

def _ref_ln(t, w, b, eps=1e-5):
    mu = jnp.mean(t, -1, keepdims=True)
    var = jnp.mean((t - mu) ** 2, -1, keepdims=True)
    return (t - mu) / jnp.sqrt(var + eps) * w + b


def _ref_encoder(x, lp, Hn):
    # x: (L=b, Nb=n+1, E) -- exactly what torch MHA (batch_first=False) sees.
    L, Nb, E = x.shape
    hd = E // Hn
    wq, wk, wv = jnp.split(lp['in_proj_w'], 3, axis=0)
    bq, bk, bv = jnp.split(lp['in_proj_b'], 3, axis=0)
    q = x @ wq.T + bq
    k = x @ wk.T + bk
    v = x @ wv.T + bv
    heads = lambda t: t.reshape(L, Nb, Hn, hd).transpose(1, 2, 0, 3)
    qh, kh, vh = heads(q), heads(k), heads(v)
    s = jnp.einsum('nhld,nhmd->nhlm', qh, kh) / math.sqrt(hd)
    p = jax.nn.softmax(s, axis=-1)
    o = jnp.einsum('nhlm,nhmd->nhld', p, vh)
    o = o.transpose(2, 0, 1, 3).reshape(L, Nb, E)
    attn = o @ lp['out_proj_w'].T + lp['out_proj_b']
    y = _ref_ln(x + attn, lp['ln1_w'], lp['ln1_b'])
    z = (y @ lp['w1'].T + lp['b1']) @ lp['w2'].T + lp['b2']
    return _ref_ln(z + z, lp['ln2_w'], lp['ln2_b'])


def vit_forward_reference(img, params, cfg):
    B, C, H, W = img.shape
    P, D, Hn = cfg['patch'], cfg['embed'], cfg['heads']
    Gh, Gw = H // P, W // P
    Np = Gh * Gw
    patches = img.reshape(B, C, Gh, P, Gw, P).transpose(0, 2, 4, 1, 3, 5)
    patches = patches.reshape(B, Np, C * P * P)
    x = patches @ params['proj_w'].reshape(D, -1).T + params['proj_b']
    cls = jnp.broadcast_to(params['cls'], (B, 1, D))
    x = jnp.concatenate([cls, x], axis=1) + params['pos'][:, :Np + 1]
    for lp in params['layers']:
        x = _ref_encoder(x, lp, Hn)
    y = _ref_ln(x[:, 0, :], params['head_ln_w'], params['head_ln_b'])
    return y @ params['head_w'].T + params['head_b']


# -------------------------------------------------------------- params init --

def init_params(key, cfg):
    C, P, D = cfg['ch'], cfg['patch'], cfg['embed']
    F, out = cfg['ffn'], cfg['out']
    Np = (cfg['img'] // P) ** 2
    keys = iter(jax.random.split(key, 6 + 8 * cfg['layers']))
    s = 0.05
    params = {
        'proj_w': jax.random.normal(next(keys), (D, C, P, P), jnp.float32) * s,
        'proj_b': jax.random.normal(next(keys), (D,), jnp.float32) * s,
        'pos':    jax.random.normal(next(keys), (1, Np + 1, D), jnp.float32) * s,
        'cls':    jax.random.uniform(next(keys), (1, 1, D), jnp.float32),
        'head_ln_w': jnp.ones((D,), jnp.float32),
        'head_ln_b': jnp.zeros((D,), jnp.float32),
        'head_w': jax.random.normal(next(keys), (out, D), jnp.float32) * s,
        'head_b': jax.random.normal(next(keys), (out,), jnp.float32) * s,
        'layers': [],
    }
    for _ in range(cfg['layers']):
        params['layers'].append({
            'in_proj_w':  jax.random.normal(next(keys), (3 * D, D), jnp.float32) * s,
            'in_proj_b':  jax.random.normal(next(keys), (3 * D,), jnp.float32) * s,
            'out_proj_w': jax.random.normal(next(keys), (D, D), jnp.float32) * s,
            'out_proj_b': jax.random.normal(next(keys), (D,), jnp.float32) * s,
            'ln1_w': jnp.ones((D,), jnp.float32),
            'ln1_b': jnp.zeros((D,), jnp.float32),
            'w1': jax.random.normal(next(keys), (F, D), jnp.float32) * s,
            'b1': jax.random.normal(next(keys), (F,), jnp.float32) * s,
            'w2': jax.random.normal(next(keys), (D, F), jnp.float32) * s,
            'b2': jax.random.normal(next(keys), (D,), jnp.float32) * s,
            'ln2_w': jnp.ones((D,), jnp.float32),
            'ln2_b': jnp.zeros((D,), jnp.float32),
        })
    return params


if __name__ == "__main__":
    cfg = dict(ch=3, img=16, patch=8, embed=32, layers=2, heads=2, ffn=64, out=10)
    key = jax.random.PRNGKey(0)
    kp, ki = jax.random.split(key)
    params = init_params(kp, cfg)
    img = jax.random.normal(ki, (2, cfg['ch'], cfg['img'], cfg['img']), jnp.float32)

    out = jax.block_until_ready(vit_forward_pallas(img, params, cfg))

    ref = jax.block_until_ready(vit_forward_reference(img, params, cfg))
    # bf16 MXU operands (f32 accumulation) in the kernels -> looser tolerance
    # than a forced-f32 path.
    np.testing.assert_allclose(np.asarray(out), np.asarray(ref),
                               rtol=2e-2, atol=2e-2)
    print("KERNEL_OK")
</pallas_src>

<mosaic_0001>
module attributes {stable_mosaic.version = 11 : i64} {
  func.func @matmul_bias_kernel(%arg0: i32, %arg1: memref<8x192xbf16, #tpu.memory_space<vmem>>, %arg2: memref<192x32xbf16, #tpu.memory_space<vmem>>, %arg3: memref<1x32xf32, #tpu.memory_space<vmem>>, %arg4: memref<8x32xf32, #tpu.memory_space<vmem>>) attributes {dimension_semantics = [#tpu.dimension_semantics<parallel>], iteration_bounds = array<i64: 1>, scalar_prefetch = 0 : i64, scratch_operands = 0 : i64, tpu.core_type = #tpu.core_type<tc>, window_params = [{transform_indices = @transform_0, window_bounds = array<i64: 8, 192>}, {pipeline_mode = #tpu.pipeline_mode<synchronous>, transform_indices = @transform_1, window_bounds = array<i64: 192, 32>}, {pipeline_mode = #tpu.pipeline_mode<synchronous>, transform_indices = @transform_2, window_bounds = array<i64: 1, 32>}, {transform_indices = @transform_3, window_bounds = array<i64: 8, 32>}]} {
    %c0 = arith.constant 0 : index
    %c0_0 = arith.constant 0 : index
    %0 = vector.load %arg1[%c0, %c0_0] : memref<8x192xbf16, #tpu.memory_space<vmem>>, vector<8x192xbf16>
    %c0_1 = arith.constant 0 : index
    %c0_2 = arith.constant 0 : index
    %1 = vector.load %arg2[%c0_1, %c0_2] : memref<192x32xbf16, #tpu.memory_space<vmem>>, vector<192x32xbf16>
    %cst = arith.constant dense<0.000000e+00> : vector<8x32xf32>
    %2 = tpu.matmul %0, %1, %cst {dimension_numbers = #tpu.dot_dimension_numbers<[1], [0], [0], [1], [0, 0, 1, 1], [], []>} : vector<8x192xbf16>, vector<192x32xbf16>, vector<8x32xf32> -> vector<8x32xf32>
    %c0_3 = arith.constant 0 : index
    %c0_4 = arith.constant 0 : index
    %3 = vector.load %arg3[%c0_3, %c0_4] : memref<1x32xf32, #tpu.memory_space<vmem>>, vector<1x32xf32>
    %4 = vector.broadcast %3 : vector<1x32xf32> to vector<8x32xf32>
    %5 = arith.addf %2, %4 : vector<8x32xf32>
    %c0_5 = arith.constant 0 : index
    %c0_6 = arith.constant 0 : index
    %6 = vector.load %arg4[%c0_5, %c0_6] : memref<8x32xf32, #tpu.memory_space<vmem>>, vector<8x32xf32>
    tpu.vector_store %arg4[%c0_5, %c0_6], %5 {strides = array<i32>} : memref<8x32xf32, #tpu.memory_space<vmem>>, vector<8x32xf32>,
    return
  }
  func.func @transform_0(%arg0: i32) -> (i32, i32) {
    %c0_i32 = arith.constant 0 : i32
    %c0_i32_0 = arith.constant 0 : i32
    return %arg0, %c0_i32 : i32, i32
  }
  func.func @transform_1(%arg0: i32) -> (i32, i32) {
    %c0_i32 = arith.constant 0 : i32
    %c0_i32_0 = arith.constant 0 : i32
    %c0_i32_1 = arith.constant 0 : i32
    return %c0_i32, %c0_i32_0 : i32, i32
  }
  func.func @transform_2(%arg0: i32) -> (i32, i32) {
    %c0_i32 = arith.constant 0 : i32
    %c0_i32_0 = arith.constant 0 : i32
    %c0_i32_1 = arith.constant 0 : i32
    return %c0_i32, %c0_i32_0 : i32, i32
  }
  func.func @transform_3(%arg0: i32) -> (i32, i32) {
    %c0_i32 = arith.constant 0 : i32
    %c0_i32_0 = arith.constant 0 : i32
    return %arg0, %c0_i32 : i32, i32
  }
}

</mosaic_0001>

<llo_original>
// kernel: tpu_custom_call.1
$region0: #{tpu_custom_call.1}
  #allocation0 [shape = 'u32[]', space=smem, size = 0x4, offset = 0x4, fixed_abs, tag = 'smem constant byte address 0x4 - core index']
  #allocation1 [shape = 'u32[144,128]{1,0:T(1,128)}', space=vmem, size = 0x12000, scoped, tag = 'internal scratch']
  %s0 = inlined_call_operand.vmem [shape: bf16[8,192], index: 0, kind: input, shape index: {}]
  %s1 = inlined_call_operand.vmem [shape: bf16[192,32], index: 1, kind: input, shape index: {}]
  %s2 = inlined_call_operand.vmem [shape: f32[1,32], index: 2, kind: input, shape index: {}]
  %s3 = inlined_call_operand.hbm [shape: f32[8,32], index: 3, kind: output, shape index: {}]
  %s4 = sld [smem:[#allocation0]]
  $region22: #{tpu_custom_call.1} parent=0
    _
  %s6 = ssub.s32 1, %s4
  %s7 = scalar_select 0, %s6, %s4
  $region1: #{tpu_custom_call.1} parent=0
    #allocation2 [shape = 'u8[4096]{0}', space=vmem, size = 0x1000, scoped, tag = 'output window, operand 0, single buffered']
    #allocation3 [shape = 's32[1]{0}', space=sflag, size = 0x4, scoped, tag = 'scoped memory for tpu_custom_call.1']
    %8 = vsyncpa [#allocation3], 0
    // Predicated region
    $region2: #{tpu_custom_call.1} parent=1 // pred_check
      _
    $region3: #{tpu_custom_call.1} parent=1 // pred_check_branch
      %10 = sbr.rel (0) target = $region5
    $region4: #{tpu_custom_call.1} parent=1 // pred_region
      _
    $region5: #{tpu_custom_call.1} parent=1 // pred_fallthru
      _
    // Predicated region
    $region6: #{tpu_custom_call.1} parent=1 // pred_check
      _
    $region7: #{tpu_custom_call.1} parent=1 // pred_check_branch
      %12 = sbr.rel (0) target = $region9
    $region8: #{tpu_custom_call.1} parent=1 // pred_region
      _
    $region9: #{tpu_custom_call.1} parent=1 // pred_fallthru
      _
    // Predicated region
    $region10: #{tpu_custom_call.1} parent=1 // pred_check
      _
    $region11: #{tpu_custom_call.1} parent=1 // pred_check_branch
      %14 = sbr.rel (0) target = $region13
    $region12: #{tpu_custom_call.1} parent=1 // pred_region
      _
    $region13: #{tpu_custom_call.1} parent=1 // pred_fallthru
      _
    %v16 = vld [vmem:[%s0] sm:$0xff]
    %v17 = vld [vmem:[%s1] sm:$0xf]
    %v18 = vld [vmem:[%s1 + $0x4] sm:$0xf]
    %v19 = vld [vmem:[%s1 + $0x8] sm:$0xf]
    %v20 = vld [vmem:[%s1 + $0xc] sm:$0xf]
    %v21 = vld [vmem:[%s1 + $0x10] sm:$0xf]
    %v22 = vld [vmem:[%s1 + $0x14] sm:$0xf]
    %v23 = vld [vmem:[%s1 + $0x18] sm:$0xf]
    %v24 = vld [vmem:[%s1 + $0x1c] sm:$0xf]
    %v25 = vld [vmem:[%s1 + $0x20] sm:$0xf]
    %v26 = vld [vmem:[%s1 + $0x24] sm:$0xf]
    %v27 = vld [vmem:[%s1 + $0x28] sm:$0xf]
    %v28 = vld [vmem:[%s1 + $0x2c] sm:$0xf]
    %v29 = vld [vmem:[%s1 + $0x30] sm:$0xf]
    %v30 = vld [vmem:[%s1 + $0x34] sm:$0xf]
    %v31 = vld [vmem:[%s1 + $0x38] sm:$0xf]
    %v32 = vld [vmem:[%s1 + $0x3c] sm:$0xf]
    %v33 = vld [vmem:[%s1 + $0x40] sm:$0xf]
    %v34 = vld [vmem:[%s1 + $0x44] sm:$0xf]
    %v35 = vld [vmem:[%s1 + $0x48] sm:$0xf]
    %v36 = vld [vmem:[%s1 + $0x4c] sm:$0xf]
    %v37 = vld [vmem:[%s1 + $0x50] sm:$0xf]
    %v38 = vld [vmem:[%s1 + $0x54] sm:$0xf]
    %v39 = vld [vmem:[%s1 + $0x58] sm:$0xf]
    %v40 = vld [vmem:[%s1 + $0x5c] sm:$0xf]
    %v41 = vld [vmem:[%s2] sm:$0x1]
    %v43 = vlaneseq
    %v44 = vshrl.u32 %v43, 7
    %v45 = vsub.s32 0, %v44
    %v46 = vrot.slane %v41, %v45
    %v49 = vunpack.c.l.b16 %v16
    %v50 = vunpack.c.h.b16 %v16
    %v51 = vpack.c.b16 %v49, %v49
    %v52 = vpack.c.b16 %v50, %v50
    %v78 = vunpack.c.l.b16 %v17
    %v79 = vunpack.c.l.b16 %v18
    %v80 = vunpack.c.l.b16 %v19
    %v81 = vunpack.c.l.b16 %v20
    %v82 = vunpack.c.l.b16 %v21
    %v83 = vunpack.c.l.b16 %v22
    %v84 = vunpack.c.l.b16 %v23
    %v85 = vunpack.c.l.b16 %v24
    %v86 = vunpack.c.l.b16 %v25
    %v87 = vunpack.c.l.b16 %v26
    %v88 = vunpack.c.l.b16 %v27
    %v89 = vunpack.c.l.b16 %v28
    %v90 = vunpack.c.l.b16 %v29
    %v91 = vunpack.c.l.b16 %v30
    %v92 = vunpack.c.l.b16 %v31
    %v93 = vunpack.c.l.b16 %v32
    %v94 = vunpack.c.l.b16 %v33
    %v95 = vunpack.c.l.b16 %v34
    %v96 = vunpack.c.l.b16 %v35
    %v97 = vunpack.c.l.b16 %v36
    %v98 = vunpack.c.l.b16 %v37
    %v99 = vunpack.c.l.b16 %v38
    %v100 = vunpack.c.l.b16 %v39
    %v101 = vunpack.c.l.b16 %v40
    %v102 = vpack.c.b16 %v79, %v78
    %v103 = vpack.c.b16 %v81, %v80
    %v104 = vpack.c.b16 %v83, %v82
    %v105 = vpack.c.b16 %v85, %v84
    %v106 = vpack.c.b16 %v87, %v86
    %v107 = vpack.c.b16 %v89, %v88
    %v108 = vpack.c.b16 %v91, %v90
    %v109 = vpack.c.b16 %v93, %v92
    %v110 = vpack.c.b16 %v95, %v94
    %v111 = vpack.c.b16 %v97, %v96
    %v112 = vpack.c.b16 %v99, %v98
    %v113 = vpack.c.b16 %v101, %v100
    %vm126 = vcmask 523264
    %v128 = vsel %vm126, %v52, 0
    %130 = vmatprep.subr.bf16.mxu0 0
    %131 = vmatpush1.bf16.msra.mxu0 %v102
    %132 = vmatprep.subr.bf16.mxu0 0
    %133 = vmatpush1.bf16.msra.mxu0 %v103
    %134 = vmatprep.subr.bf16.mxu0 0
    %135 = vmatpush1.bf16.msra.mxu0 %v104
    %136 = vmatprep.subr.bf16.mxu0 0
    %137 = vmatpush1.bf16.msra.mxu0 %v105
    %138 = vmatprep.subr.bf16.mxu0 0
    %139 = vmatpush1.bf16.msra.mxu0 %v106
    %140 = vmatprep.subr.bf16.mxu0 0
    %141 = vmatpush1.bf16.msra.mxu0 %v107
    %142 = vmatprep.subr.bf16.mxu0 0
    %143 = vmatpush1.bf16.msra.mxu0 %v108
    %144 = vmatprep.subr.bf16.mxu0 0
    %145 = vmatpush1.bf16.msra.mxu0 %v109
    %146 = vmatprep.subr.bf16.mxu0 0
    %147 = vmatpush1.bf16.msra.mxu0 %v110
    %148 = vmatprep.subr.bf16.mxu0 0
    %149 = vmatpush1.bf16.msra.mxu0 %v111
    %150 = vmatprep.subr.bf16.mxu0 0
    %151 = vmatpush1.bf16.msra.mxu0 %v112
    %152 = vmatprep.subr.bf16.mxu0 0
    %153 = vmatpush1.bf16.msra.mxu0 %v113
    %154 = vmatprep.subr.bf16.mxu0 0
    %155 = vmatpush1.bf16.msra.mxu0 0
    %156 = vmatprep.subr.bf16.mxu0 0
    %157 = vmatpush1.bf16.msra.mxu0 0
    %158 = vmatprep.subr.bf16.mxu0 0
    %159 = vmatpush1.bf16.msra.mxu0 0
    %160 = vmatprep.subr.bf16.mxu0 0
    %161 = vmatpush1.bf16.msra.mxu0 0
    %162 = vmatprep.mubr.bf16.mxu0 %v128
    %163 = vmatmul.mubr.bf16.gmra.mrb[0].mxu0 %v51
    %v164 = vpop.f32.mrb[0].mxu0
    %v165 = vadd.f32 %v46, %v164
    %v166 = vpop.f32.mrb[0].mxu0
    %v167 = vpop.f32.mrb[0].mxu0
    %v168 = vpop.f32.mrb[0].mxu0
    %169 = vdwg.mxu0
    %vm170 = vcmask 261120
    %171 = vst.msk [vmem:[#allocation2] sm:$0xff] %vm170, %v165
    // Predicated region
    $region14: #{tpu_custom_call.1} parent=1 // pred_check
      _
    $region15: #{tpu_custom_call.1} parent=1 // pred_check_branch
      %173 = sbr.rel (0) target = $region17
    $region16: #{tpu_custom_call.1} parent=1 // pred_region
      %s175 = ssub.s32 128, 128
      %176 = vsyncadd [#allocation3], %s175
      %s178 = sshll.u32 [#allocation2], 4
      %s179 = int_to_ptr.vmem [resolvable:$true] %s178
      %181 = dma.vmem_to_hbm [thread:$0]  %s179, 128, %s3, [#allocation3]
    $region17: #{tpu_custom_call.1} parent=1 // pred_fallthru
      _
    // Predicated region
    $region18: #{tpu_custom_call.1} parent=1 // pred_check
      _
    $region19: #{tpu_custom_call.1} parent=1 // pred_check_branch
      %183 = sbr.rel (0) target = $region21
    $region20: #{tpu_custom_call.1} parent=1 // pred_region
      %184 = dma.done [#allocation3], 128
    $region21: #{tpu_custom_call.1} parent=1 // pred_fallthru
      _
    %185 = vsyncpa [#allocation3], 1

</llo_original>
